<compile_context>
chip_gen: v7x
topology: tpu7x:2x2x1
jax: 0.10.0
libtpu: 0.0.40
codegen_flags: <defaults>
</compile_context>

<pallas_src>
import functools

import jax
import jax.numpy as jnp
from jax.experimental import pallas as pl
from jax.experimental.pallas import tpu as pltpu

_LANE = 128
_SUBLANE = 8


def _cdiv(a, b):
    return (a + b - 1) // b


def _round_up(a, m):
    return _cdiv(a, m) * m


def _pad2d(a, rows, cols):
    a = jnp.asarray(a)
    r, c = a.shape
    return jnp.pad(a, ((0, rows - r), (0, cols - c)))


def _encoder_kernel(x_ref, y_ref, w1x_ref, w1y_ref, b1_ref, w2_ref, b2_ref,
                    w3_ref, b3_ref, o_ref, *, tb, n, compute_dtype):
    cd = compute_dtype
    x = x_ref[...].astype(cd)                  # (tb*n, x_dim)
    y = y_ref[...].astype(cd)                  # (tb*n, y_dim)

    # Layer 1: concat folded into split weights: [x|y] @ w1 == x@w1x + y@w1y.
    h1 = (jnp.dot(x, w1x_ref[...].astype(cd), preferred_element_type=jnp.float32)
          + jnp.dot(y, w1y_ref[...].astype(cd), preferred_element_type=jnp.float32)
          + b1_ref[...])
    h1 = jnp.maximum(h1, 0.0)                  # f32, (tb*n, H1p)

    # Layer 2.
    h2 = jnp.dot(h1.astype(cd), w2_ref[...].astype(cd),
                 preferred_element_type=jnp.float32) + b2_ref[...]
    h2 = jnp.maximum(h2, 0.0)                  # f32, (tb*n, H2p)

    # Aggregate: mean over num_points, folded BEFORE the final linear
    # (exact since there is no nonlinearity after w3).
    s = jnp.mean(h2.reshape(tb, n, h2.shape[-1]), axis=1)   # (tb, H2p) f32

    # Layer 3 on the aggregated representation; lane-dense (tb, Rp) store.
    o_ref[...] = (jnp.dot(s.astype(cd), w3_ref[...].astype(cd),
                          preferred_element_type=jnp.float32) + b3_ref[...])


def deterministic_encoder(x, y, params, *, compute_dtype=jnp.float32,
                          block_batch=None):
    """x: (B, N, x_dim), y: (B, N, y_dim) -> r: (B, r_dim)."""
    w1, b1, w2, b2, w3, b3 = params
    B, N, x_dim = x.shape
    y_dim = y.shape[-1]
    H1, H2, r_dim = w1.shape[1], w2.shape[1], w3.shape[1]

    # Lane-pad hidden / output widths to 128 (zero padding is mathematically
    # inert through Linear + ReLU; padded output lanes are sliced off below).
    H1p = _round_up(H1, _LANE)
    H2p = _round_up(H2, _LANE)
    Rp = _round_up(r_dim, _LANE)

    b1 = jnp.asarray(b1).reshape(1, -1)
    b2 = jnp.asarray(b2).reshape(1, -1)
    b3 = jnp.asarray(b3).reshape(1, -1)

    w1x = _pad2d(w1[:x_dim], x_dim, H1p)   # (x_dim, H1p)
    w1y = _pad2d(w1[x_dim:], y_dim, H1p)   # (y_dim, H1p)
    b1p = _pad2d(b1, 1, H1p)
    w2p = _pad2d(w2, H1p, H2p)
    b2p = _pad2d(b2, 1, H2p)
    w3p = _pad2d(w3, H2p, Rp)
    b3p = _pad2d(b3, 1, Rp)

    # Batch tile: target >=256 rows for the MXU M dimension, multiple of 8
    # sublanes for a dense output block, bounded so per-step activations stay
    # small (v7x has only 64 MiB VMEM).  NOTE: a very large N would also want
    # tiling over the points axis, which is not needed at these shapes.
    if block_batch is None:
        tb = _cdiv(256, N)
        tb = min(tb, _cdiv(4096, N))            # ~<=4K rows per grid step
        tb = _round_up(max(tb, 1), _SUBLANE)
        tb = min(tb, _round_up(B, _SUBLANE))
    else:
        tb = block_batch

    Bp = _round_up(B, tb)
    if Bp != B:
        pad = Bp - B
        x = jnp.pad(x, ((0, pad), (0, 0), (0, 0)))
        y = jnp.pad(y, ((0, pad), (0, 0), (0, 0)))

    # Host-side flatten is free (contiguous, row-major) and avoids any
    # in-kernel reshape of narrow-lane inputs.
    xf = x.reshape(Bp * N, x_dim)
    yf = y.reshape(Bp * N, y_dim)

    rows = tb * N
    grid = (Bp // tb,)

    kernel = functools.partial(_encoder_kernel, tb=tb, n=N,
                               compute_dtype=compute_dtype)

    const = lambda shape: pl.BlockSpec(shape, lambda i: (0, 0))

    out = pl.pallas_call(
        kernel,
        out_shape=jax.ShapeDtypeStruct((Bp, Rp), jnp.float32),
        grid_spec=pltpu.PrefetchScalarGridSpec(
            num_scalar_prefetch=0,
            grid=grid,
            in_specs=[
                pl.BlockSpec((rows, x_dim), lambda i: (i, 0)),
                pl.BlockSpec((rows, y_dim), lambda i: (i, 0)),
                const((x_dim, H1p)),
                const((y_dim, H1p)),
                const((1, H1p)),
                const((H1p, H2p)),
                const((1, H2p)),
                const((H2p, Rp)),
                const((1, Rp)),
            ],
            out_specs=pl.BlockSpec((tb, Rp), lambda i: (i, 0)),
        ),
        compiler_params=pltpu.CompilerParams(
            dimension_semantics=("parallel",),
        ),
    )(xf, yf, w1x, w1y, b1p, w2p, b2p, w3p, b3p)

    return out[:B, :r_dim]


def init_params(key, x_dim, y_dim, r_dim):
    """Deterministic synthetic parameter init (matches nn.Linear shapes)."""
    din = x_dim + y_dim
    k1, k2, k3 = jax.random.split(key, 3)
    w1 = jax.random.normal(k1, (din, 64), jnp.float32) * (1.0 / jnp.sqrt(din))
    b1 = jnp.zeros((1, 64), jnp.float32)
    w2 = jax.random.normal(k2, (64, 64), jnp.float32) * (1.0 / 8.0)
    b2 = jnp.zeros((1, 64), jnp.float32)
    w3 = jax.random.normal(k3, (64, r_dim), jnp.float32) * (1.0 / 8.0)
    b3 = jnp.zeros((1, r_dim), jnp.float32)
    return (w1, b1, w2, b2, w3, b3)


def reference(x, y, params):
    """Pure-JAX reference for correctness checking."""
    w1, b1, w2, b2, w3, b3 = params
    h = jnp.concatenate([x, y], axis=-1)
    h = jnp.maximum(h @ w1 + b1, 0.0)
    h = jnp.maximum(h @ w2 + b2, 0.0)
    r = h @ w3 + b3
    return r.mean(axis=1)


if __name__ == "__main__":
    B, N, x_dim, y_dim, r_dim = 2, 8, 3, 2, 32

    key = jax.random.PRNGKey(0)
    kx, ky, kp = jax.random.split(key, 3)
    x = jax.random.normal(kx, (B, N, x_dim), jnp.float32)
    y = jax.random.normal(ky, (B, N, y_dim), jnp.float32)
    params = init_params(kp, x_dim, y_dim, r_dim)

    ref = reference(x, y, params)

    # f32 path (exact up to f32 summation-order; also the v5e elementwise path).
    out = jax.block_until_ready(deterministic_encoder(x, y, params))
    assert out.shape == (B, r_dim)
    assert jnp.allclose(out, ref, atol=1e-4, rtol=1e-4), float(
        jnp.max(jnp.abs(out - ref)))

    # bf16 MXU-input path (v6e/v7x optimization); f32 accumulate + elementwise.
    out_bf16 = jax.block_until_ready(
        deterministic_encoder(x, y, params, compute_dtype=jnp.bfloat16))
    assert out_bf16.shape == (B, r_dim)
    assert jnp.allclose(out_bf16, ref, atol=1e-1, rtol=1e-1)

    print("KERNEL_OK")
</pallas_src>

<mosaic_0001>
module attributes {stable_mosaic.version = 11 : i64} {
  func.func @_encoder_kernel(%arg0: i32, %arg1: memref<64x3xf32, #tpu.memory_space<vmem>>, %arg2: memref<64x2xf32, #tpu.memory_space<vmem>>, %arg3: memref<3x128xf32, #tpu.memory_space<vmem>>, %arg4: memref<2x128xf32, #tpu.memory_space<vmem>>, %arg5: memref<1x128xf32, #tpu.memory_space<vmem>>, %arg6: memref<128x128xf32, #tpu.memory_space<vmem>>, %arg7: memref<1x128xf32, #tpu.memory_space<vmem>>, %arg8: memref<128x128xf32, #tpu.memory_space<vmem>>, %arg9: memref<1x128xf32, #tpu.memory_space<vmem>>, %arg10: memref<8x128xf32, #tpu.memory_space<vmem>>) attributes {dimension_semantics = [#tpu.dimension_semantics<parallel>], iteration_bounds = array<i64: 1>, scalar_prefetch = 0 : i64, scratch_operands = 0 : i64, tpu.core_type = #tpu.core_type<tc>, window_params = [{transform_indices = @transform_0, window_bounds = array<i64: 64, 3>}, {transform_indices = @transform_1, window_bounds = array<i64: 64, 2>}, {pipeline_mode = #tpu.pipeline_mode<synchronous>, transform_indices = @transform_2, window_bounds = array<i64: 3, 128>}, {pipeline_mode = #tpu.pipeline_mode<synchronous>, transform_indices = @transform_3, window_bounds = array<i64: 2, 128>}, {pipeline_mode = #tpu.pipeline_mode<synchronous>, transform_indices = @transform_4, window_bounds = array<i64: 1, 128>}, {pipeline_mode = #tpu.pipeline_mode<synchronous>, transform_indices = @transform_5, window_bounds = array<i64: 128, 128>}, {pipeline_mode = #tpu.pipeline_mode<synchronous>, transform_indices = @transform_6, window_bounds = array<i64: 1, 128>}, {pipeline_mode = #tpu.pipeline_mode<synchronous>, transform_indices = @transform_7, window_bounds = array<i64: 128, 128>}, {pipeline_mode = #tpu.pipeline_mode<synchronous>, transform_indices = @transform_8, window_bounds = array<i64: 1, 128>}, {transform_indices = @transform_9, window_bounds = array<i64: 8, 128>}]} {
    %c0 = arith.constant 0 : index
    %c0_0 = arith.constant 0 : index
    %0 = vector.load %arg1[%c0, %c0_0] : memref<64x3xf32, #tpu.memory_space<vmem>>, vector<64x3xf32>
    %c0_1 = arith.constant 0 : index
    %c0_2 = arith.constant 0 : index
    %1 = vector.load %arg2[%c0_1, %c0_2] : memref<64x2xf32, #tpu.memory_space<vmem>>, vector<64x2xf32>
    %c0_3 = arith.constant 0 : index
    %c0_4 = arith.constant 0 : index
    %2 = vector.load %arg3[%c0_3, %c0_4] : memref<3x128xf32, #tpu.memory_space<vmem>>, vector<3x128xf32>
    %cst = arith.constant dense<0.000000e+00> : vector<64x128xf32>
    %3 = tpu.matmul %0, %2, %cst {dimension_numbers = #tpu.dot_dimension_numbers<[1], [0], [0], [1], [0, 0, 1, 1], [], []>} : vector<64x3xf32>, vector<3x128xf32>, vector<64x128xf32> -> vector<64x128xf32>
    %c0_5 = arith.constant 0 : index
    %c0_6 = arith.constant 0 : index
    %4 = vector.load %arg4[%c0_5, %c0_6] : memref<2x128xf32, #tpu.memory_space<vmem>>, vector<2x128xf32>
    %cst_7 = arith.constant dense<0.000000e+00> : vector<64x128xf32>
    %5 = tpu.matmul %1, %4, %cst_7 {dimension_numbers = #tpu.dot_dimension_numbers<[1], [0], [0], [1], [0, 0, 1, 1], [], []>} : vector<64x2xf32>, vector<2x128xf32>, vector<64x128xf32> -> vector<64x128xf32>
    %6 = arith.addf %3, %5 : vector<64x128xf32>
    %c0_8 = arith.constant 0 : index
    %c0_9 = arith.constant 0 : index
    %7 = vector.load %arg5[%c0_8, %c0_9] : memref<1x128xf32, #tpu.memory_space<vmem>>, vector<1x128xf32>
    %8 = vector.broadcast %7 : vector<1x128xf32> to vector<64x128xf32>
    %9 = arith.addf %6, %8 : vector<64x128xf32>
    %cst_10 = arith.constant 0.000000e+00 : f32
    %10 = vector.broadcast %cst_10 : f32 to vector<64x128xf32>
    %11 = arith.maximumf %9, %10 : vector<64x128xf32>
    %c0_11 = arith.constant 0 : index
    %c0_12 = arith.constant 0 : index
    %12 = vector.load %arg6[%c0_11, %c0_12] : memref<128x128xf32, #tpu.memory_space<vmem>>, vector<128x128xf32>
    %cst_13 = arith.constant dense<0.000000e+00> : vector<64x128xf32>
    %13 = tpu.matmul %11, %12, %cst_13 {dimension_numbers = #tpu.dot_dimension_numbers<[1], [0], [0], [1], [0, 0, 1, 1], [], []>} : vector<64x128xf32>, vector<128x128xf32>, vector<64x128xf32> -> vector<64x128xf32>
    %c0_14 = arith.constant 0 : index
    %c0_15 = arith.constant 0 : index
    %14 = vector.load %arg7[%c0_14, %c0_15] : memref<1x128xf32, #tpu.memory_space<vmem>>, vector<1x128xf32>
    %15 = vector.broadcast %14 : vector<1x128xf32> to vector<64x128xf32>
    %16 = arith.addf %13, %15 : vector<64x128xf32>
    %cst_16 = arith.constant 0.000000e+00 : f32
    %17 = vector.broadcast %cst_16 : f32 to vector<64x128xf32>
    %18 = arith.maximumf %16, %17 : vector<64x128xf32>
    %19 = vector.shape_cast %18 : vector<64x128xf32> to vector<8x8x128xf32>
    %cst_17 = arith.constant dense<0.000000e+00> : vector<8x128xf32>
    %20 = vector.multi_reduction <add>, %19, %cst_17 [1] : vector<8x8x128xf32> to vector<8x128xf32>
    %cst_18 = arith.constant 8.000000e+00 : f32
    %21 = vector.broadcast %cst_18 : f32 to vector<8x128xf32>
    %22 = arith.divf %20, %21 : vector<8x128xf32>
    %c0_19 = arith.constant 0 : index
    %c0_20 = arith.constant 0 : index
    %23 = vector.load %arg8[%c0_19, %c0_20] : memref<128x128xf32, #tpu.memory_space<vmem>>, vector<128x128xf32>
    %cst_21 = arith.constant dense<0.000000e+00> : vector<8x128xf32>
    %24 = tpu.matmul %22, %23, %cst_21 {dimension_numbers = #tpu.dot_dimension_numbers<[1], [0], [0], [1], [0, 0, 1, 1], [], []>} : vector<8x128xf32>, vector<128x128xf32>, vector<8x128xf32> -> vector<8x128xf32>
    %c0_22 = arith.constant 0 : index
    %c0_23 = arith.constant 0 : index
    %25 = vector.load %arg9[%c0_22, %c0_23] : memref<1x128xf32, #tpu.memory_space<vmem>>, vector<1x128xf32>
    %26 = vector.broadcast %25 : vector<1x128xf32> to vector<8x128xf32>
    %27 = arith.addf %24, %26 : vector<8x128xf32>
    %c0_24 = arith.constant 0 : index
    %c0_25 = arith.constant 0 : index
    %28 = vector.load %arg10[%c0_24, %c0_25] : memref<8x128xf32, #tpu.memory_space<vmem>>, vector<8x128xf32>
    tpu.vector_store %arg10[%c0_24, %c0_25], %27 {strides = array<i32>} : memref<8x128xf32, #tpu.memory_space<vmem>>, vector<8x128xf32>,
    return
  }
  func.func @transform_0(%arg0: i32) -> (i32, i32) {
    %c0_i32 = arith.constant 0 : i32
    %c0_i32_0 = arith.constant 0 : i32
    return %arg0, %c0_i32 : i32, i32
  }
  func.func @transform_1(%arg0: i32) -> (i32, i32) {
    %c0_i32 = arith.constant 0 : i32
    %c0_i32_0 = arith.constant 0 : i32
    return %arg0, %c0_i32 : i32, i32
  }
  func.func @transform_2(%arg0: i32) -> (i32, i32) {
    %c0_i32 = arith.constant 0 : i32
    %c0_i32_0 = arith.constant 0 : i32
    %c0_i32_1 = arith.constant 0 : i32
    return %c0_i32, %c0_i32_0 : i32, i32
  }
  func.func @transform_3(%arg0: i32) -> (i32, i32) {
    %c0_i32 = arith.constant 0 : i32
    %c0_i32_0 = arith.constant 0 : i32
    %c0_i32_1 = arith.constant 0 : i32
    return %c0_i32, %c0_i32_0 : i32, i32
  }
  func.func @transform_4(%arg0: i32) -> (i32, i32) {
    %c0_i32 = arith.constant 0 : i32
    %c0_i32_0 = arith.constant 0 : i32
    %c0_i32_1 = arith.constant 0 : i32
    return %c0_i32, %c0_i32_0 : i32, i32
  }
  func.func @transform_5(%arg0: i32) -> (i32, i32) {
    %c0_i32 = arith.constant 0 : i32
    %c0_i32_0 = arith.constant 0 : i32
    %c0_i32_1 = arith.constant 0 : i32
    return %c0_i32, %c0_i32_0 : i32, i32
  }
  func.func @transform_6(%arg0: i32) -> (i32, i32) {
    %c0_i32 = arith.constant 0 : i32
    %c0_i32_0 = arith.constant 0 : i32
    %c0_i32_1 = arith.constant 0 : i32
    return %c0_i32, %c0_i32_0 : i32, i32
  }
  func.func @transform_7(%arg0: i32) -> (i32, i32) {
    %c0_i32 = arith.constant 0 : i32
    %c0_i32_0 = arith.constant 0 : i32
    %c0_i32_1 = arith.constant 0 : i32
    return %c0_i32, %c0_i32_0 : i32, i32
  }
  func.func @transform_8(%arg0: i32) -> (i32, i32) {
    %c0_i32 = arith.constant 0 : i32
    %c0_i32_0 = arith.constant 0 : i32
    %c0_i32_1 = arith.constant 0 : i32
    return %c0_i32, %c0_i32_0 : i32, i32
  }
  func.func @transform_9(%arg0: i32) -> (i32, i32) {
    %c0_i32 = arith.constant 0 : i32
    %c0_i32_0 = arith.constant 0 : i32
    return %arg0, %c0_i32 : i32, i32
  }
}

</mosaic_0001>

<llo_original>
// kernel: tpu_custom_call.1
$region0: #{tpu_custom_call.1}
  #allocation0 [shape = 'u32[]', space=smem, size = 0x4, offset = 0x4, fixed_abs, tag = 'smem constant byte address 0x4 - core index']
  #allocation1 [shape = 'u32[144,128]{1,0:T(1,128)}', space=vmem, size = 0x12000, scoped, tag = 'internal scratch']
  %s0 = inlined_call_operand.vmem [shape: f32[64,3], index: 0, kind: input, shape index: {}]
  %s1 = inlined_call_operand.vmem [shape: f32[64,2], index: 1, kind: input, shape index: {}]
  %s2 = inlined_call_operand.vmem [shape: f32[3,128], index: 2, kind: input, shape index: {}]
  %s3 = inlined_call_operand.vmem [shape: f32[2,128], index: 3, kind: input, shape index: {}]
  %s4 = inlined_call_operand.vmem [shape: f32[1,128], index: 4, kind: input, shape index: {}]
  %s5 = inlined_call_operand.vmem [shape: f32[128,128], index: 5, kind: input, shape index: {}]
  %s6 = inlined_call_operand.vmem [shape: f32[1,128], index: 6, kind: input, shape index: {}]
  %s7 = inlined_call_operand.hbm [shape: f32[128,128], index: 7, kind: input, shape index: {}]
  %s8 = inlined_call_operand.vmem [shape: f32[1,128], index: 8, kind: input, shape index: {}]
  %s9 = inlined_call_operand.hbm [shape: f32[8,128], index: 9, kind: output, shape index: {}]
  %s10 = sld [smem:[#allocation0]]
  $region50: #{tpu_custom_call.1} parent=0
    _
  %s12 = ssub.s32 1, %s10
  %s13 = scalar_select 0, %s12, %s10
  $region1: #{tpu_custom_call.1} parent=0
    #allocation2 [shape = 'u8[65536]{0}', space=vmem, size = 0x10000, scoped, tag = 'input window, operand 7, single buffered']
    #allocation3 [shape = 's32[1]{0}', space=sflag, size = 0x4, scoped, tag = 'scoped memory for tpu_custom_call.1']
    #allocation4 [shape = 's32[1]{0}', space=sflag, size = 0x4, scoped, tag = 'scoped memory for tpu_custom_call.1']
    #allocation5 [shape = 'u8[4096]{0}', space=vmem, size = 0x1000, scoped, tag = 'output window, operand 0, single buffered']
    %14 = vsyncpa [#allocation3], 0
    %15 = vsyncpa [#allocation4], 0
    // Predicated region
    $region2: #{tpu_custom_call.1} parent=1 // pred_check
      _
    $region3: #{tpu_custom_call.1} parent=1 // pred_check_branch
      %17 = sbr.rel (0) target = $region5
    $region4: #{tpu_custom_call.1} parent=1 // pred_region
      _
    $region5: #{tpu_custom_call.1} parent=1 // pred_fallthru
      _
    // Predicated region
    $region6: #{tpu_custom_call.1} parent=1 // pred_check
      _
    $region7: #{tpu_custom_call.1} parent=1 // pred_check_branch
      %19 = sbr.rel (0) target = $region9
    $region8: #{tpu_custom_call.1} parent=1 // pred_region
      _
    $region9: #{tpu_custom_call.1} parent=1 // pred_fallthru
      _
    // Predicated region
    $region10: #{tpu_custom_call.1} parent=1 // pred_check
      _
    $region11: #{tpu_custom_call.1} parent=1 // pred_check_branch
      %21 = sbr.rel (0) target = $region13
    $region12: #{tpu_custom_call.1} parent=1 // pred_region
      _
    $region13: #{tpu_custom_call.1} parent=1 // pred_fallthru
      _
    // Predicated region
    $region14: #{tpu_custom_call.1} parent=1 // pred_check
      _
    $region15: #{tpu_custom_call.1} parent=1 // pred_check_branch
      %23 = sbr.rel (0) target = $region17
    $region16: #{tpu_custom_call.1} parent=1 // pred_region
      _
    $region17: #{tpu_custom_call.1} parent=1 // pred_fallthru
      _
    // Predicated region
    $region18: #{tpu_custom_call.1} parent=1 // pred_check
      _
    $region19: #{tpu_custom_call.1} parent=1 // pred_check_branch
      %25 = sbr.rel (0) target = $region21
    $region20: #{tpu_custom_call.1} parent=1 // pred_region
      _
    $region21: #{tpu_custom_call.1} parent=1 // pred_fallthru
      _
    // Predicated region
    $region22: #{tpu_custom_call.1} parent=1 // pred_check
      _
    $region23: #{tpu_custom_call.1} parent=1 // pred_check_branch
      %27 = sbr.rel (0) target = $region25
    $region24: #{tpu_custom_call.1} parent=1 // pred_region
      _
    $region25: #{tpu_custom_call.1} parent=1 // pred_fallthru
      _
    // Predicated region
    $region26: #{tpu_custom_call.1} parent=1 // pred_check
      _
    $region27: #{tpu_custom_call.1} parent=1 // pred_check_branch
      %29 = sbr.rel (0) target = $region29
    $region28: #{tpu_custom_call.1} parent=1 // pred_region
      _
    $region29: #{tpu_custom_call.1} parent=1 // pred_fallthru
      _
    // Predicated region
    $region30: #{tpu_custom_call.1} parent=1 // pred_check
      _
    $region31: #{tpu_custom_call.1} parent=1 // pred_check_branch
      %31 = sbr.rel (0) target = $region33
    $region32: #{tpu_custom_call.1} parent=1 // pred_region
      %s33 = ssub.s32 2048, 2048
      %34 = vsyncadd [#allocation3], %s33
      %s35 = sshll.u32 [#allocation2], 4
      %s36 = int_to_ptr.vmem [resolvable:$true] %s35
      %41 = dma.hbm_to_vmem [thread:$0]  %s7, 2048, %s36, [#allocation3], 128, 128, 8
    $region33: #{tpu_custom_call.1} parent=1 // pred_fallthru
      _
    // Predicated region
    $region34: #{tpu_custom_call.1} parent=1 // pred_check
      _
    $region35: #{tpu_custom_call.1} parent=1 // pred_check_branch
      %43 = sbr.rel (0) target = $region37
    $region36: #{tpu_custom_call.1} parent=1 // pred_region
      _
    $region37: #{tpu_custom_call.1} parent=1 // pred_fallthru
      _
    // Predicated region
    $region38: #{tpu_custom_call.1} parent=1 // pred_check
      _
    $region39: #{tpu_custom_call.1} parent=1 // pred_check_branch
      %45 = sbr.rel (0) target = $region41
    $region40: #{tpu_custom_call.1} parent=1 // pred_region
      %46 = dma.done [#allocation3], 2048
    $region41: #{tpu_custom_call.1} parent=1 // pred_fallthru
      _
    %v47 = vld [vmem:[%s0] sm:$0xff]
    %v48 = vld [vmem:[%s0 + $0x8] sm:$0xff]
    %v49 = vld [vmem:[%s0 + $0x10] sm:$0xff]
    %v50 = vld [vmem:[%s0 + $0x18] sm:$0xff]
    %v51 = vld [vmem:[%s0 + $0x20] sm:$0xff]
    %v52 = vld [vmem:[%s0 + $0x28] sm:$0xff]
    %v53 = vld [vmem:[%s0 + $0x30] sm:$0xff]
    %v54 = vld [vmem:[%s0 + $0x38] sm:$0xff]
    %v55 = vld [vmem:[%s1] sm:$0xff]
    %v56 = vld [vmem:[%s1 + $0x8] sm:$0xff]
    %v57 = vld [vmem:[%s1 + $0x10] sm:$0xff]
    %v58 = vld [vmem:[%s1 + $0x18] sm:$0xff]
    %v59 = vld [vmem:[%s1 + $0x20] sm:$0xff]
    %v60 = vld [vmem:[%s1 + $0x28] sm:$0xff]
    %v61 = vld [vmem:[%s1 + $0x30] sm:$0xff]
    %v62 = vld [vmem:[%s1 + $0x38] sm:$0xff]
    %v63 = vld [vmem:[%s2] sm:$0x7]
    %v64 = vld [vmem:[%s3] sm:$0x3]
    %vm65 = vcmask 15360
    %v67 = vsel %vm65, %v55, 0
    %v70 = vsel %vm65, %v56, 0
    %v73 = vsel %vm65, %v57, 0
    %v76 = vsel %vm65, %v58, 0
    %v79 = vsel %vm65, %v59, 0
    %v82 = vsel %vm65, %v60, 0
    %v85 = vsel %vm65, %v61, 0
    %v88 = vsel %vm65, %v62, 0
    %vm90 = vcmask 1041408
    %v92 = vsel %vm90, %v64, 0
    %94 = vmatprep.subr.mxu0 0.0
    %95 = vmatpush1.msra.mxu0 %v92
    %96 = vmatprep.subr.mxu0 0.0
    %97 = vmatpush1.msra.mxu0 0.0
    %98 = vmatprep.subr.mxu0 0.0
    %99 = vmatpush1.msra.mxu0 0.0
    %100 = vmatprep.subr.mxu0 0.0
    %101 = vmatpush1.msra.mxu0 0.0
    %102 = vmatprep.subr.mxu0 0.0
    %103 = vmatpush1.msra.mxu0 0.0
    %104 = vmatprep.subr.mxu0 0.0
    %105 = vmatpush1.msra.mxu0 0.0
    %106 = vmatprep.subr.mxu0 0.0
    %107 = vmatpush1.msra.mxu0 0.0
    %108 = vmatprep.subr.mxu0 0.0
    %109 = vmatpush1.msra.mxu0 0.0
    %110 = vmatprep.subr.mxu0 0.0
    %111 = vmatpush1.msra.mxu0 0.0
    %112 = vmatprep.subr.mxu0 0.0
    %113 = vmatpush1.msra.mxu0 0.0
    %114 = vmatprep.subr.mxu0 0.0
    %115 = vmatpush1.msra.mxu0 0.0
    %116 = vmatprep.subr.mxu0 0.0
    %117 = vmatpush1.msra.mxu0 0.0
    %118 = vmatprep.subr.mxu0 0.0
    %119 = vmatpush1.msra.mxu0 0.0
    %120 = vmatprep.subr.mxu0 0.0
    %121 = vmatpush1.msra.mxu0 0.0
    %122 = vmatprep.subr.mxu0 0.0
    %123 = vmatpush1.msra.mxu0 0.0
    %124 = vmatprep.subr.mxu0 0.0
    %125 = vmatpush1.msra.mxu0 0.0
    %126 = vmatprep.subr.mxu0 0.0
    %127 = vmatpush1.msra.mxu0 0.0
    %128 = vmatprep.subr.mxu0 0.0
    %129 = vmatpush1.msra.mxu0 0.0
    %130 = vmatprep.subr.mxu0 0.0
    %131 = vmatpush1.msra.mxu0 0.0
    %132 = vmatprep.subr.mxu0 0.0
    %133 = vmatpush1.msra.mxu0 0.0
    %134 = vmatprep.subr.mxu0 0.0
    %135 = vmatpush1.msra.mxu0 0.0
    %136 = vmatprep.subr.mxu0 0.0
    %137 = vmatpush1.msra.mxu0 0.0
    %138 = vmatprep.subr.mxu0 0.0
    %139 = vmatpush1.msra.mxu0 0.0
    %140 = vmatprep.subr.mxu0 0.0
    %141 = vmatpush1.msra.mxu0 0.0
    %142 = vmatprep.subr.mxu0 0.0
    %143 = vmatpush1.msra.mxu0 0.0
    %144 = vmatprep.subr.mxu0 0.0
    %145 = vmatpush1.msra.mxu0 0.0
    %146 = vmatprep.subr.mxu0 0.0
    %147 = vmatpush1.msra.mxu0 0.0
    %148 = vmatprep.subr.mxu0 0.0
    %149 = vmatpush1.msra.mxu0 0.0
    %150 = vmatprep.subr.mxu0 0.0
    %151 = vmatpush1.msra.mxu0 0.0
    %152 = vmatprep.subr.mxu0 0.0
    %153 = vmatpush1.msra.mxu0 0.0
    %154 = vmatprep.subr.mxu0 0.0
    %155 = vmatpush1.msra.mxu0 0.0
    %156 = vmatprep.subr.mxu0 0.0
    %157 = vmatpush1.msra.mxu0 0.0
    %158 = vmatprep.mubr.f32.mxu0 0.0
    %159 = vmatmul.mubr.f32.gmra.mrb[0].mxu0 %v67
    %v160 = vpop.f32.mrb[0].mxu0
    %v161 = vadd.f32 0.0, %v160
    %v162 = vpop.f32.mrb[0].mxu0
    %163 = vmatprep.mubr.f32.mxu0 0.0
    %164 = vmatmul.mubr.f32.gmra.mrb[0].mxu0 %v70
    %v165 = vpop.f32.mrb[0].mxu0
    %v166 = vadd.f32 0.0, %v165
    %v167 = vpop.f32.mrb[0].mxu0
    %168 = vmatprep.mubr.f32.mxu0 0.0
    %169 = vmatmul.mubr.f32.gmra.mrb[0].mxu0 %v73
    %v170 = vpop.f32.mrb[0].mxu0
    %v171 = vadd.f32 0.0, %v170
    %v172 = vpop.f32.mrb[0].mxu0
    %173 = vmatprep.mubr.f32.mxu0 0.0
    %174 = vmatmul.mubr.f32.gmra.mrb[0].mxu0 %v76
    %v175 = vpop.f32.mrb[0].mxu0
    %v176 = vadd.f32 0.0, %v175
    %v177 = vpop.f32.mrb[0].mxu0
    %178 = vmatprep.mubr.f32.mxu0 0.0
    %179 = vmatmul.mubr.f32.gmra.mrb[0].mxu0 %v79
    %v180 = vpop.f32.mrb[0].mxu0
    %v181 = vadd.f32 0.0, %v180
    %v182 = vpop.f32.mrb[0].mxu0
    %183 = vmatprep.mubr.f32.mxu0 0.0
    %184 = vmatmul.mubr.f32.gmra.mrb[0].mxu0 %v82
    %v185 = vpop.f32.mrb[0].mxu0
    %v186 = vadd.f32 0.0, %v185
    %v187 = vpop.f32.mrb[0].mxu0
    %188 = vmatprep.mubr.f32.mxu0 0.0
    %189 = vmatmul.mubr.f32.gmra.mrb[0].mxu0 %v85
    %v190 = vpop.f32.mrb[0].mxu0
    %v191 = vadd.f32 0.0, %v190
    %v192 = vpop.f32.mrb[0].mxu0
    %193 = vmatprep.mubr.f32.mxu0 0.0
    %194 = vmatmul.mubr.f32.gmra.mrb[0].mxu0 %v88
    %v195 = vpop.f32.mrb[0].mxu0
    %v196 = vadd.f32 0.0, %v195
    %v197 = vpop.f32.mrb[0].mxu0
    %198 = vdwg.mxu0
    %vm199 = vcmask 23552
    %v201 = vsel %vm199, %v47, 0
    %v204 = vsel %vm199, %v48, 0
    %v207 = vsel %vm199, %v49, 0
    %v210 = vsel %vm199, %v50, 0
    %v213 = vsel %vm199, %v51, 0
    %v216 = vsel %vm199, %v52, 0
    %v219 = vsel %vm199, %v53, 0
    %v222 = vsel %vm199, %v54, 0
    %vm224 = vcmask 1042432
    %v226 = vsel %vm224, %v63, 0
    %228 = vmatprep.subr.mxu0 0.0
    %229 = vmatpush1.msra.mxu0 %v226
    %230 = vmatprep.subr.mxu0 0.0
    %231 = vmatpush1.msra.mxu0 0.0
    %232 = vmatprep.subr.mxu0 0.0
    %233 = vmatpush1.msra.mxu0 0.0
    %234 = vmatprep.subr.mxu0 0.0
    %235 = vmatpush1.msra.mxu0 0.0
    %236 = vmatprep.subr.mxu0 0.0
    %237 = vmatpush1.msra.mxu0 0.0
    %238 = vmatprep.subr.mxu0 0.0
    %239 = vmatpush1.msra.mxu0 0.0
    %240 = vmatprep.subr.mxu0 0.0
    %241 = vmatpush1.msra.mxu0 0.0
    %242 = vmatprep.subr.mxu0 0.0
    %243 = vmatpush1.msra.mxu0 0.0
    %244 = vmatprep.subr.mxu0 0.0
    %245 = vmatpush1.msra.mxu0 0.0
    %246 = vmatprep.subr.mxu0 0.0
    %247 = vmatpush1.msra.mxu0 0.0
    %248 = vmatprep.subr.mxu0 0.0
    %249 = vmatpush1.msra.mxu0 0.0
    %250 = vmatprep.subr.mxu0 0.0
    %251 = vmatpush1.msra.mxu0 0.0
    %252 = vmatprep.subr.mxu0 0.0
    %253 = vmatpush1.msra.mxu0 0.0
    %254 = vmatprep.subr.mxu0 0.0
    %255 = vmatpush1.msra.mxu0 0.0
    %256 = vmatprep.subr.mxu0 0.0
    %257 = vmatpush1.msra.mxu0 0.0
    %258 = vmatprep.subr.mxu0 0.0
    %259 = vmatpush1.msra.mxu0 0.0
    %260 = vmatprep.subr.mxu0 0.0
    %261 = vmatpush1.msra.mxu0 0.0
    %262 = vmatprep.subr.mxu0 0.0
    %263 = vmatpush1.msra.mxu0 0.0
    %264 = vmatprep.subr.mxu0 0.0
    %265 = vmatpush1.msra.mxu0 0.0
    %266 = vmatprep.subr.mxu0 0.0
    %267 = vmatpush1.msra.mxu0 0.0
    %268 = vmatprep.subr.mxu0 0.0
    %269 = vmatpush1.msra.mxu0 0.0
    %270 = vmatprep.subr.mxu0 0.0
    %271 = vmatpush1.msra.mxu0 0.0
    %272 = vmatprep.subr.mxu0 0.0
    %273 = vmatpush1.msra.mxu0 0.0
    %274 = vmatprep.subr.mxu0 0.0
    %275 = vmatpush1.msra.mxu0 0.0
    %276 = vmatprep.subr.mxu0 0.0
    %277 = vmatpush1.msra.mxu0 0.0
    %278 = vmatprep.subr.mxu0 0.0
    %279 = vmatpush1.msra.mxu0 0.0
    %280 = vmatprep.subr.mxu0 0.0
    %281 = vmatpush1.msra.mxu0 0.0
    %282 = vmatprep.subr.mxu0 0.0
    %283 = vmatpush1.msra.mxu0 0.0
    %284 = vmatprep.subr.mxu0 0.0
    %285 = vmatpush1.msra.mxu0 0.0
    %286 = vmatprep.subr.mxu0 0.0
    %287 = vmatpush1.msra.mxu0 0.0
    %288 = vmatprep.subr.mxu0 0.0
    %289 = vmatpush1.msra.mxu0 0.0
    %290 = vmatprep.subr.mxu0 0.0
    %291 = vmatpush1.msra.mxu0 0.0
    %292 = vmatprep.mubr.f32.mxu0 0.0
    %293 = vmatmul.mubr.f32.gmra.mrb[0].mxu0 %v201
    %v294 = vpop.f32.mrb[0].mxu0
    %v295 = vadd.f32 %v161, %v294
    %v296 = vpop.f32.mrb[0].mxu0
    %297 = vmatprep.mubr.f32.mxu0 0.0
    %298 = vmatmul.mubr.f32.gmra.mrb[0].mxu0 %v204
    %v299 = vpop.f32.mrb[0].mxu0
    %v300 = vadd.f32 %v166, %v299
    %v301 = vpop.f32.mrb[0].mxu0
    %302 = vmatprep.mubr.f32.mxu0 0.0
    %303 = vmatmul.mubr.f32.gmra.mrb[0].mxu0 %v207
    %v304 = vpop.f32.mrb[0].mxu0
    %v305 = vadd.f32 %v171, %v304
    %v306 = vpop.f32.mrb[0].mxu0
    %307 = vmatprep.mubr.f32.mxu0 0.0
    %308 = vmatmul.mubr.f32.gmra.mrb[0].mxu0 %v210
    %v309 = vpop.f32.mrb[0].mxu0
    %v310 = vadd.f32 %v176, %v309
    %v311 = vpop.f32.mrb[0].mxu0
    %312 = vmatprep.mubr.f32.mxu0 0.0
    %313 = vmatmul.mubr.f32.gmra.mrb[0].mxu0 %v213
    %v314 = vpop.f32.mrb[0].mxu0
    %v315 = vadd.f32 %v181, %v314
    %v316 = vpop.f32.mrb[0].mxu0
    %317 = vmatprep.mubr.f32.mxu0 0.0
    %318 = vmatmul.mubr.f32.gmra.mrb[0].mxu0 %v216
    %v319 = vpop.f32.mrb[0].mxu0
    %v320 = vadd.f32 %v186, %v319
    %v321 = vpop.f32.mrb[0].mxu0
    %322 = vmatprep.mubr.f32.mxu0 0.0
    %323 = vmatmul.mubr.f32.gmra.mrb[0].mxu0 %v219
    %v324 = vpop.f32.mrb[0].mxu0
    %v325 = vadd.f32 %v191, %v324
    %v326 = vpop.f32.mrb[0].mxu0
    %327 = vmatprep.mubr.f32.mxu0 0.0
    %328 = vmatmul.mubr.f32.gmra.mrb[0].mxu0 %v222
    %v329 = vpop.f32.mrb[0].mxu0
    %v330 = vadd.f32 %v196, %v329
    %v331 = vpop.f32.mrb[0].mxu0
    %332 = vdwg.mxu0
    %v333 = vld [vmem:[%s4] sm:$0x1]
    %v335 = vlaneseq
    %v336 = vshrl.u32 %v335, 7
    %v337 = vsub.s32 0, %v336
    %v338 = vrot.slane %v333, %v337
    %v340 = vadd.f32 %v295, %v338
    %v341 = vadd.f32 %v300, %v338
    %v342 = vadd.f32 %v305, %v338
    %v343 = vadd.f32 %v310, %v338
    %v344 = vadd.f32 %v315, %v338
    %v345 = vadd.f32 %v320, %v338
    %v346 = vadd.f32 %v325, %v338
    %v347 = vadd.f32 %v330, %v338
    %v348 = vmax.f32 %v340, 0.0
    %v349 = vmax.f32 %v341, 0.0
    %v350 = vmax.f32 %v342, 0.0
    %v351 = vmax.f32 %v343, 0.0
    %v352 = vmax.f32 %v344, 0.0
    %v353 = vmax.f32 %v345, 0.0
    %v354 = vmax.f32 %v346, 0.0
    %v355 = vmax.f32 %v347, 0.0
    %v356 = vld [vmem:[%s5] sm:$0xff]
    %v357 = vld [vmem:[%s5 + $0x8] sm:$0xff]
    %v358 = vld [vmem:[%s5 + $0x10] sm:$0xff]
    %v359 = vld [vmem:[%s5 + $0x18] sm:$0xff]
    %v360 = vld [vmem:[%s5 + $0x20] sm:$0xff]
    %v361 = vld [vmem:[%s5 + $0x28] sm:$0xff]
    %v362 = vld [vmem:[%s5 + $0x30] sm:$0xff]
    %v363 = vld [vmem:[%s5 + $0x38] sm:$0xff]
    %v364 = vld [vmem:[%s5 + $0x40] sm:$0xff]
    %v365 = vld [vmem:[%s5 + $0x48] sm:$0xff]
    %v366 = vld [vmem:[%s5 + $0x50] sm:$0xff]
    %v367 = vld [vmem:[%s5 + $0x58] sm:$0xff]
    %v368 = vld [vmem:[%s5 + $0x60] sm:$0xff]
    %v369 = vld [vmem:[%s5 + $0x68] sm:$0xff]
    %v370 = vld [vmem:[%s5 + $0x70] sm:$0xff]
    %v371 = vld [vmem:[%s5 + $0x78] sm:$0xff]
    %v372 = vld [vmem:[%s6] sm:$0x1]
    %v374 = vlaneseq
    %v375 = vshrl.u32 %v374, 7
    %v376 = vsub.s32 0, %v375
    %v377 = vrot.slane %v372, %v376
    %379 = vmatprep.subr.mxu0 0.0
    %380 = vmatpush1.msra.mxu0 %v356
    %381 = vmatprep.subr.mxu0 0.0
    %382 = vmatpush1.msra.mxu0 %v357
    %383 = vmatprep.subr.mxu0 0.0
    %384 = vmatpush1.msra.mxu0 %v358
    %385 = vmatprep.subr.mxu0 0.0
    %386 = vmatpush1.msra.mxu0 %v359
    %387 = vmatprep.subr.mxu0 0.0
    %388 = vmatpush1.msra.mxu0 %v360
    %389 = vmatprep.subr.mxu0 0.0
    %390 = vmatpush1.msra.mxu0 %v361
    %391 = vmatprep.subr.mxu0 0.0
    %392 = vmatpush1.msra.mxu0 %v362
    %393 = vmatprep.subr.mxu0 0.0
    %394 = vmatpush1.msra.mxu0 %v363
    %395 = vmatprep.subr.mxu0 0.0
    %396 = vmatpush1.msra.mxu0 %v364
    %397 = vmatprep.subr.mxu0 0.0
    %398 = vmatpush1.msra.mxu0 %v365
    %399 = vmatprep.subr.mxu0 0.0
    %400 = vmatpush1.msra.mxu0 %v366
    %401 = vmatprep.subr.mxu0 0.0
    %402 = vmatpush1.msra.mxu0 %v367
    %403 = vmatprep.subr.mxu0 0.0
    %404 = vmatpush1.msra.mxu0 %v368
    %405 = vmatprep.subr.mxu0 0.0
    %406 = vmatpush1.msra.mxu0 %v369
    %407 = vmatprep.subr.mxu0 0.0
    %408 = vmatpush1.msra.mxu0 %v370
    %409 = vmatprep.subr.mxu0 0.0
    %410 = vmatpush1.msra.mxu0 %v371
    %411 = vmatprep.subr.mxu0 0.0
    %412 = vmatpush1.msra.mxu0 0.0
    %413 = vmatprep.subr.mxu0 0.0
    %414 = vmatpush1.msra.mxu0 0.0
    %415 = vmatprep.subr.mxu0 0.0
    %416 = vmatpush1.msra.mxu0 0.0
    %417 = vmatprep.subr.mxu0 0.0
    %418 = vmatpush1.msra.mxu0 0.0
    %419 = vmatprep.subr.mxu0 0.0
    %420 = vmatpush1.msra.mxu0 0.0
    %421 = vmatprep.subr.mxu0 0.0
    %422 = vmatpush1.msra.mxu0 0.0
    %423 = vmatprep.subr.mxu0 0.0
    %424 = vmatpush1.msra.mxu0 0.0
    %425 = vmatprep.subr.mxu0 0.0
    %426 = vmatpush1.msra.mxu0 0.0
    %427 = vmatprep.subr.mxu0 0.0
    %428 = vmatpush1.msra.mxu0 0.0
    %429 = vmatprep.subr.mxu0 0.0
    %430 = vmatpush1.msra.mxu0 0.0
    %431 = vmatprep.subr.mxu0 0.0
    %432 = vmatpush1.msra.mxu0 0.0
    %433 = vmatprep.subr.mxu0 0.0
    %434 = vmatpush1.msra.mxu0 0.0
    %435 = vmatprep.subr.mxu0 0.0
    %436 = vmatpush1.msra.mxu0 0.0
    %437 = vmatprep.subr.mxu0 0.0
    %438 = vmatpush1.msra.mxu0 0.0
    %439 = vmatprep.subr.mxu0 0.0
    %440 = vmatpush1.msra.mxu0 0.0
    %441 = vmatprep.subr.mxu0 0.0
    %442 = vmatpush1.msra.mxu0 0.0
    %443 = vmatprep.mubr.f32.mxu0 0.0
    %444 = vmatmul.mubr.f32.gmra.mrb[0].mxu0 %v348
    %v445 = vpop.f32.mrb[0].mxu0
    %v446 = vadd.f32 %v377, %v445
    %v447 = vpop.f32.mrb[0].mxu0
    %448 = vmatprep.mubr.f32.mxu0 0.0
    %449 = vmatmul.mubr.f32.gmra.mrb[0].mxu0 %v349
    %v450 = vpop.f32.mrb[0].mxu0
    %v451 = vadd.f32 %v377, %v450
    %v452 = vpop.f32.mrb[0].mxu0
    %453 = vmatprep.mubr.f32.mxu0 0.0
    %454 = vmatmul.mubr.f32.gmra.mrb[0].mxu0 %v350
    %v455 = vpop.f32.mrb[0].mxu0
    %v456 = vadd.f32 %v377, %v455
    %v457 = vpop.f32.mrb[0].mxu0
    %458 = vmatprep.mubr.f32.mxu0 0.0
    %459 = vmatmul.mubr.f32.gmra.mrb[0].mxu0 %v351
    %v460 = vpop.f32.mrb[0].mxu0
    %v461 = vadd.f32 %v377, %v460
    %v462 = vpop.f32.mrb[0].mxu0
    %463 = vmatprep.mubr.f32.mxu0 0.0
    %464 = vmatmul.mubr.f32.gmra.mrb[0].mxu0 %v352
    %v465 = vpop.f32.mrb[0].mxu0
    %v466 = vadd.f32 %v377, %v465
    %v467 = vpop.f32.mrb[0].mxu0
    %468 = vmatprep.mubr.f32.mxu0 0.0
    %469 = vmatmul.mubr.f32.gmra.mrb[0].mxu0 %v353
    %v470 = vpop.f32.mrb[0].mxu0
    %v471 = vadd.f32 %v377, %v470
    %v472 = vpop.f32.mrb[0].mxu0
    %473 = vmatprep.mubr.f32.mxu0 0.0
    %474 = vmatmul.mubr.f32.gmra.mrb[0].mxu0 %v354
    %v475 = vpop.f32.mrb[0].mxu0
    %v476 = vadd.f32 %v377, %v475
    %v477 = vpop.f32.mrb[0].mxu0
    %478 = vmatprep.mubr.f32.mxu0 0.0
    %479 = vmatmul.mubr.f32.gmra.mrb[0].mxu0 %v355
    %v480 = vpop.f32.mrb[0].mxu0
    %v481 = vadd.f32 %v377, %v480
    %v482 = vpop.f32.mrb[0].mxu0
    %483 = vdwg.mxu0
    %v484 = vmax.f32 %v446, 0.0
    %v485 = vmax.f32 %v451, 0.0
    %v486 = vmax.f32 %v456, 0.0
    %v487 = vmax.f32 %v461, 0.0
    %v488 = vmax.f32 %v466, 0.0
    %v489 = vmax.f32 %v471, 0.0
    %v490 = vmax.f32 %v476, 0.0
    %v491 = vmax.f32 %v481, 0.0
    %v492 = vrot.slane %v484, 4
    %v493 = vadd.f32 %v484, %v492
    %v494 = vrot.slane %v493, 2
    %v495 = vadd.f32 %v493, %v494
    %v496 = vrot.slane %v495, 1
    %v497 = vadd.f32 %v495, %v496
    %v498 = vrot.slane %v485, 4
    %v499 = vadd.f32 %v485, %v498
    %v500 = vrot.slane %v499, 2
    %v501 = vadd.f32 %v499, %v500
    %v502 = vrot.slane %v501, 1
    %v503 = vadd.f32 %v501, %v502
    %v504 = vrot.slane %v486, 4
    %v505 = vadd.f32 %v486, %v504
    %v506 = vrot.slane %v505, 2
    %v507 = vadd.f32 %v505, %v506
    %v508 = vrot.slane %v507, 1
    %v509 = vadd.f32 %v507, %v508
    %v510 = vrot.slane %v487, 4
    %v511 = vadd.f32 %v487, %v510
    %v512 = vrot.slane %v511, 2
    %v513 = vadd.f32 %v511, %v512
    %v514 = vrot.slane %v513, 1
    %v515 = vadd.f32 %v513, %v514
    %v516 = vrot.slane %v488, 4
    %v517 = vadd.f32 %v488, %v516
    %v518 = vrot.slane %v517, 2
    %v519 = vadd.f32 %v517, %v518
    %v520 = vrot.slane %v519, 1
    %v521 = vadd.f32 %v519, %v520
    %v522 = vrot.slane %v489, 4
    %v523 = vadd.f32 %v489, %v522
    %v524 = vrot.slane %v523, 2
    %v525 = vadd.f32 %v523, %v524
    %v526 = vrot.slane %v525, 1
    %v527 = vadd.f32 %v525, %v526
    %v528 = vrot.slane %v490, 4
    %v529 = vadd.f32 %v490, %v528
    %v530 = vrot.slane %v529, 2
    %v531 = vadd.f32 %v529, %v530
    %v532 = vrot.slane %v531, 1
    %v533 = vadd.f32 %v531, %v532
    %v534 = vrot.slane %v491, 4
    %v535 = vadd.f32 %v491, %v534
    %v536 = vrot.slane %v535, 2
    %v537 = vadd.f32 %v535, %v536
    %v538 = vrot.slane %v537, 1
    %v539 = vadd.f32 %v537, %v538
    %v540 = vrcp.pop 8.0
    %v541 = vmul.f32 %v497, %v540
    %v542 = vmul.f32 %v503, %v540
    %v543 = vmul.f32 %v509, %v540
    %v544 = vmul.f32 %v515, %v540
    %v545 = vmul.f32 %v521, %v540
    %v546 = vmul.f32 %v527, %v540
    %v547 = vmul.f32 %v533, %v540
    %v548 = vmul.f32 %v539, %v540
    %v549 = vld [vmem:[#allocation2] sm:$0xff]
    %v550 = vld [vmem:[#allocation2 + $0x8] sm:$0xff]
    %v551 = vld [vmem:[#allocation2 + $0x10] sm:$0xff]
    %v552 = vld [vmem:[#allocation2 + $0x18] sm:$0xff]
    %v553 = vld [vmem:[#allocation2 + $0x20] sm:$0xff]
    %v554 = vld [vmem:[#allocation2 + $0x28] sm:$0xff]
    %v555 = vld [vmem:[#allocation2 + $0x30] sm:$0xff]
    %v556 = vld [vmem:[#allocation2 + $0x38] sm:$0xff]
    %v557 = vld [vmem:[#allocation2 + $0x40] sm:$0xff]
    %v558 = vld [vmem:[#allocation2 + $0x48] sm:$0xff]
    %v559 = vld [vmem:[#allocation2 + $0x50] sm:$0xff]
    %v560 = vld [vmem:[#allocation2 + $0x58] sm:$0xff]
    %v561 = vld [vmem:[#allocation2 + $0x60] sm:$0xff]
    %v562 = vld [vmem:[#allocation2 + $0x68] sm:$0xff]
    %v563 = vld [vmem:[#allocation2 + $0x70] sm:$0xff]
    %v564 = vld [vmem:[#allocation2 + $0x78] sm:$0xff]
    %v565 = vld [vmem:[%s8] sm:$0x1]
    %v567 = vlaneseq
    %v568 = vshrl.u32 %v567, 7
    %v569 = vsub.s32 0, %v568
    %v570 = vrot.slane %v565, %v569
    %vm580 = vcmask 1041409
    %v581 = vsel %vm580, %v542, %v541
    %vm582 = vcmask 1042434
    %v583 = vsel %vm582, %v543, %v581
    %vm584 = vcmask 1043459
    %v585 = vsel %vm584, %v544, %v583
    %vm586 = vcmask 1044484
    %v587 = vsel %vm586, %v545, %v585
    %vm588 = vcmask 1045509
    %v589 = vsel %vm588, %v546, %v587
    %vm590 = vcmask 1046534
    %v591 = vsel %vm590, %v547, %v589
    %vm592 = vcmask 1047559
    %v593 = vsel %vm592, %v548, %v591
    %595 = vmatprep.subr.mxu0 0.0
    %596 = vmatpush1.msra.mxu0 %v549
    %597 = vmatprep.subr.mxu0 0.0
    %598 = vmatpush1.msra.mxu0 %v550
    %599 = vmatprep.subr.mxu0 0.0
    %600 = vmatpush1.msra.mxu0 %v551
    %601 = vmatprep.subr.mxu0 0.0
    %602 = vmatpush1.msra.mxu0 %v552
    %603 = vmatprep.subr.mxu0 0.0
    %604 = vmatpush1.msra.mxu0 %v553
    %605 = vmatprep.subr.mxu0 0.0
    %606 = vmatpush1.msra.mxu0 %v554
    %607 = vmatprep.subr.mxu0 0.0
    %608 = vmatpush1.msra.mxu0 %v555
    %609 = vmatprep.subr.mxu0 0.0
    %610 = vmatpush1.msra.mxu0 %v556
    %611 = vmatprep.subr.mxu0 0.0
    %612 = vmatpush1.msra.mxu0 %v557
    %613 = vmatprep.subr.mxu0 0.0
    %614 = vmatpush1.msra.mxu0 %v558
    %615 = vmatprep.subr.mxu0 0.0
    %616 = vmatpush1.msra.mxu0 %v559
    %617 = vmatprep.subr.mxu0 0.0
    %618 = vmatpush1.msra.mxu0 %v560
    %619 = vmatprep.subr.mxu0 0.0
    %620 = vmatpush1.msra.mxu0 %v561
    %621 = vmatprep.subr.mxu0 0.0
    %622 = vmatpush1.msra.mxu0 %v562
    %623 = vmatprep.subr.mxu0 0.0
    %624 = vmatpush1.msra.mxu0 %v563
    %625 = vmatprep.subr.mxu0 0.0
    %626 = vmatpush1.msra.mxu0 %v564
    %627 = vmatprep.subr.mxu0 0.0
    %628 = vmatpush1.msra.mxu0 0.0
    %629 = vmatprep.subr.mxu0 0.0
    %630 = vmatpush1.msra.mxu0 0.0
    %631 = vmatprep.subr.mxu0 0.0
    %632 = vmatpush1.msra.mxu0 0.0
    %633 = vmatprep.subr.mxu0 0.0
    %634 = vmatpush1.msra.mxu0 0.0
    %635 = vmatprep.subr.mxu0 0.0
    %636 = vmatpush1.msra.mxu0 0.0
    %637 = vmatprep.subr.mxu0 0.0
    %638 = vmatpush1.msra.mxu0 0.0
    %639 = vmatprep.subr.mxu0 0.0
    %640 = vmatpush1.msra.mxu0 0.0
    %641 = vmatprep.subr.mxu0 0.0
    %642 = vmatpush1.msra.mxu0 0.0
    %643 = vmatprep.subr.mxu0 0.0
    %644 = vmatpush1.msra.mxu0 0.0
    %645 = vmatprep.subr.mxu0 0.0
    %646 = vmatpush1.msra.mxu0 0.0
    %647 = vmatprep.subr.mxu0 0.0
    %648 = vmatpush1.msra.mxu0 0.0
    %649 = vmatprep.subr.mxu0 0.0
    %650 = vmatpush1.msra.mxu0 0.0
    %651 = vmatprep.subr.mxu0 0.0
    %652 = vmatpush1.msra.mxu0 0.0
    %653 = vmatprep.subr.mxu0 0.0
    %654 = vmatpush1.msra.mxu0 0.0
    %655 = vmatprep.subr.mxu0 0.0
    %656 = vmatpush1.msra.mxu0 0.0
    %657 = vmatprep.subr.mxu0 0.0
    %658 = vmatpush1.msra.mxu0 0.0
    %659 = vmatprep.mubr.f32.mxu0 0.0
    %660 = vmatmul.mubr.f32.gmra.mrb[0].mxu0 %v593
    %v661 = vpop.f32.mrb[0].mxu0
    %v662 = vadd.f32 %v570, %v661
    %v663 = vpop.f32.mrb[0].mxu0
    %664 = vdwg.mxu0
    %665 = vst [vmem:[#allocation5] sm:$0xff] %v662
    // Predicated region
    $region42: #{tpu_custom_call.1} parent=1 // pred_check
      _
    $region43: #{tpu_custom_call.1} parent=1 // pred_check_branch
      %667 = sbr.rel (0) target = $region45
    $region44: #{tpu_custom_call.1} parent=1 // pred_region
      %s669 = ssub.s32 128, 128
      %670 = vsyncadd [#allocation4], %s669
      %s672 = sshll.u32 [#allocation5], 4
      %s673 = int_to_ptr.vmem [resolvable:$true] %s672
      %675 = dma.vmem_to_hbm [thread:$0]  %s673, 128, %s9, [#allocation4]
    $region45: #{tpu_custom_call.1} parent=1 // pred_fallthru
      _
    // Predicated region
    $region46: #{tpu_custom_call.1} parent=1 // pred_check
      _
    $region47: #{tpu_custom_call.1} parent=1 // pred_check_branch
      %677 = sbr.rel (0) target = $region49
    $region48: #{tpu_custom_call.1} parent=1 // pred_region
      %678 = dma.done [#allocation4], 128
    $region49: #{tpu_custom_call.1} parent=1 // pred_fallthru
      _
    %679 = vsyncpa [#allocation3], 1
    %680 = vsyncpa [#allocation4], 1

</llo_original>
